<compile_context>
chip_gen: v6e
topology: v6e:2x2x1
jax: 0.10.0
libtpu: 0.0.40
codegen_flags: <defaults>
</compile_context>

<pallas_src>
import math

import jax
import jax.numpy as jnp
from jax.experimental import pallas as pl
from jax.experimental.pallas import tpu as pltpu

_VMEM_LIMIT = 32 * 1024 * 1024      # scoped VMEM; safe on v5e/v6e/v7x
_TILE_BUDGET = 16 * 1024 * 1024     # budget for blocks + live intermediates


def _round_up(x, m):
    return ((x + m - 1) // m) * m


def _pad_rows(x, rows):
    pad = rows - x.shape[0]
    if pad == 0:
        return x
    return jnp.pad(x, ((0, pad),) + ((0, 0),) * (x.ndim - 1))


# ----------------------------------------------------------------------------
# Pallas kernels
# ----------------------------------------------------------------------------
def kv_proj_kernel(feat_ref, w_ref, b_ref, kv_ref):
    # fused fc1 -> (w_ks | w_vs): one wide bf16 matmul, f32 accumulation.
    x = jnp.dot(feat_ref[...].astype(jnp.bfloat16), w_ref[...],
                preferred_element_type=jnp.float32)
    kv_ref[...] = (x + b_ref[...]).astype(kv_ref.dtype)


def attn_kernel(pre_ref, kv_ref, rel_ref,
                wq_ref, bq_ref,
                dw1_ref, db1_ref, dw2_ref, db2_ref,
                gw1_ref, gb1_ref, gw2_ref, gb2_ref,
                fc2w_ref, fc2b_ref,
                out_ref, attn_ref):
    D = attn_ref.shape[-1]

    pre = pre_ref[...]                                   # (TM, d_points) f32
    pre_bf = pre.astype(jnp.bfloat16)

    # q projection (fused fc1 @ w_qs) from the residual tile: no HBM round trip.
    q = jnp.dot(pre_bf, wq_ref[...],
                preferred_element_type=jnp.float32) + bq_ref[...]     # (TM, D)

    kv = kv_ref[...]                                     # (TM, K, 2D) bf16
    k = kv[..., :D].astype(jnp.float32)
    v = kv[..., D:].astype(jnp.float32)

    # positional encoding layer 1: contraction over 3 done as VPU broadcast FMAs
    rel = rel_ref[...]                                   # (TM, K, 3) f32
    w1 = dw1_ref[...]                                    # (3, D) f32
    pos = (rel[:, :, 0:1] * w1[0:1, :][None]
           + rel[:, :, 1:2] * w1[1:2, :][None]
           + rel[:, :, 2:3] * w1[2:3, :][None]
           + db1_ref[...][None])                         # (TM, K, D)
    pos = jnp.maximum(pos, 0.0)
    # positional encoding layer 2: bf16 MXU matmul, f32 accumulation
    pos = jnp.einsum("mkd,de->mke", pos.astype(jnp.bfloat16), dw2_ref[...],
                     preferred_element_type=jnp.float32) + db2_ref[...][None]

    # gamma MLP on (q - k + pos); softmax 1/sqrt(D) scale is pre-folded into gw2/gb2
    qk = q[:, None, :] - k + pos                         # (TM, K, D)
    g = jnp.einsum("mkd,de->mke", qk.astype(jnp.bfloat16), gw1_ref[...],
                   preferred_element_type=jnp.float32) + gb1_ref[...][None]
    g = jnp.maximum(g, 0.0)
    logits = jnp.einsum("mkd,de->mke", g.astype(jnp.bfloat16), gw2_ref[...],
                        preferred_element_type=jnp.float32) + gb2_ref[...][None]

    # softmax over the neighbor axis (dim=-2 in the PyTorch code)
    m = jnp.max(logits, axis=1, keepdims=True)
    e = jnp.exp(logits - m)
    attn = e * pl.reciprocal(jnp.sum(e, axis=1, keepdims=True), approx=True)
    attn_ref[...] = attn

    # res = einsum('bmnf,bmnf->bmf', attn, v + pos); fc2 + residual
    resd = jnp.sum(attn * (v + pos), axis=1)             # (TM, D)
    out = jnp.dot(resd.astype(jnp.bfloat16), fc2w_ref[...],
                  preferred_element_type=jnp.float32)
    out_ref[...] = out + fc2b_ref[...] + pre             # (TM, d_points)


# ----------------------------------------------------------------------------
# Tile sizing (padded-VMEM budget, re-derived per shape)
# ----------------------------------------------------------------------------
def _lane(c):
    return _round_up(max(c, 1), 128)


def _sub(r):
    return _round_up(max(r, 1), 8)


def _proj_tile_rows(M, d_points, two_d):
    per_row = 2 * (_lane(d_points) * 4 + _lane(two_d) * 2)   # double-buffered io
    tm = (_TILE_BUDGET // per_row) // 8 * 8
    tm = max(8, min(tm, 1024))
    return min(tm, _round_up(M, 8))


def _attn_tile_rows(M, K, D, d_points):
    kv_in = _sub(K) * _lane(2 * D) * 2        # bf16
    rel_in = _sub(K) * _lane(3) * 4
    pre_in = _lane(d_points) * 4
    attn_out = _sub(K) * _lane(D) * 4
    res_out = _lane(d_points) * 4
    per_row = 2 * (kv_in + rel_in + pre_in + attn_out + res_out)  # double-buffered
    per_row += 6 * _sub(K) * _lane(D) * 4     # live f32 (TM,K,D) intermediates
    tm = (_TILE_BUDGET // per_row) // 8 * 8
    tm = max(8, min(tm, 512))
    return min(tm, _round_up(M, 8))


# ----------------------------------------------------------------------------
# pallas_call wrappers
# ----------------------------------------------------------------------------
def kv_projection_pallas(feat, w_kv, b_kv, tm):
    M, d_points = feat.shape
    two_d = w_kv.shape[1]
    row2 = lambda i: (i, 0)
    full2 = lambda i: (0, 0)
    flops = 2 * M * d_points * two_d
    bytes_acc = M * d_points * 4 + M * two_d * 2 + d_points * two_d * 2 + two_d * 4
    return pl.pallas_call(
        kv_proj_kernel,
        out_shape=jax.ShapeDtypeStruct((M, two_d), jnp.bfloat16),
        grid=(M // tm,),
        in_specs=[pl.BlockSpec((tm, d_points), row2),
                  pl.BlockSpec((d_points, two_d), full2),
                  pl.BlockSpec((1, two_d), full2)],
        out_specs=pl.BlockSpec((tm, two_d), row2),
        compiler_params=pltpu.CompilerParams(
            dimension_semantics=("parallel",),
            vmem_limit_bytes=_VMEM_LIMIT),
        cost_estimate=pl.CostEstimate(flops=int(flops), transcendentals=0,
                                      bytes_accessed=int(bytes_acc)),
    )(feat, w_kv, b_kv)


def attention_pallas(pre, kv_g, rel, w_q, b_q,
                     dw1, db1, dw2, db2, gw1, gb1, gw2, gb2,
                     fc2_w, fc2_b, tm):
    M, K, two_d = kv_g.shape
    D = two_d // 2
    d_points = pre.shape[-1]
    row2 = lambda i: (i, 0)
    row3 = lambda i: (i, 0, 0)
    full2 = lambda i: (0, 0)

    flops = 2 * M * (d_points * D + 3 * K * D * D + D * d_points) + 12 * M * K * D
    transcendentals = M * K * D
    bytes_acc = (M * (2 * d_points * 4 + K * two_d * 2 + K * 3 * 4 + K * D * 4)
                 + (3 * D * D + 2 * d_points * D) * 2 + 8 * D * 4)

    return pl.pallas_call(
        attn_kernel,
        out_shape=(jax.ShapeDtypeStruct((M, d_points), jnp.float32),
                   jax.ShapeDtypeStruct((M, K, D), jnp.float32)),
        grid=(M // tm,),
        in_specs=[
            pl.BlockSpec((tm, d_points), row2),   # pre (residual + q source)
            pl.BlockSpec((tm, K, two_d), row3),   # gathered k|v (bf16)
            pl.BlockSpec((tm, K, 3), row3),       # relative xyz
            pl.BlockSpec((d_points, D), full2),   # fused W_q (bf16)
            pl.BlockSpec((1, D), full2),          # fused b_q
            pl.BlockSpec((3, D), full2),          # fc_delta W1 (f32, VPU path)
            pl.BlockSpec((1, D), full2),          # fc_delta b1
            pl.BlockSpec((D, D), full2),          # fc_delta W2 (bf16)
            pl.BlockSpec((1, D), full2),          # fc_delta b2
            pl.BlockSpec((D, D), full2),          # fc_gamma W1 (bf16)
            pl.BlockSpec((1, D), full2),          # fc_gamma b1
            pl.BlockSpec((D, D), full2),          # fc_gamma W2 * 1/sqrt(D) (bf16)
            pl.BlockSpec((1, D), full2),          # fc_gamma b2 * 1/sqrt(D)
            pl.BlockSpec((D, d_points), full2),   # fc2 W (bf16)
            pl.BlockSpec((1, d_points), full2),   # fc2 b
        ],
        out_specs=(pl.BlockSpec((tm, d_points), row2),
                   pl.BlockSpec((tm, K, D), row3)),
        compiler_params=pltpu.CompilerParams(
            dimension_semantics=("parallel",),
            vmem_limit_bytes=_VMEM_LIMIT),
        cost_estimate=pl.CostEstimate(flops=int(flops),
                                      transcendentals=int(transcendentals),
                                      bytes_accessed=int(bytes_acc)),
    )(pre, kv_g, rel, w_q, b_q, dw1, db1, dw2, db2,
      gw1, gb1, gw2, gb2, fc2_w, fc2_b)


# ----------------------------------------------------------------------------
# Full forward pass (glue in plain JAX + the two Pallas kernels)
# ----------------------------------------------------------------------------
def transformer_block_forward(xyz, features, params, k_neighbors):
    # xyz: [B, 3, N], features: [B, d_points, N]  (PyTorch layout)
    B, _, N = xyz.shape
    d_points = features.shape[1]
    D = params["fc1_w"].shape[1]
    K = k_neighbors
    M = B * N

    xyz_t = jnp.transpose(xyz, (0, 2, 1)).astype(jnp.float32)      # [B, N, 3]
    pre = jnp.transpose(features, (0, 2, 1)).astype(jnp.float32)   # [B, N, d_points]

    # KNN: argsort of pairwise squared distances.
    # TODO(synk): argsort has no Pallas equivalent; KNN selection stays in JAX glue.
    diff = xyz_t[:, :, None, :] - xyz_t[:, None, :, :]
    dists = jnp.sum(diff * diff, axis=-1)                          # [B, N, N]
    knn_idx = jnp.argsort(dists, axis=-1)[:, :, :K]                # [B, N, K]
    batch_idx = jnp.arange(B)[:, None, None]
    rel = xyz_t[:, :, None, :] - xyz_t[batch_idx, knn_idx]         # [B, N, K, 3]

    feat_flat = pre.reshape(M, d_points)

    # Wrapper-side algebraic fusion of fc1 into q/k/v (tiny fp32 precompute).
    hi = jax.lax.Precision.HIGHEST
    fc1_w, fc1_b = params["fc1_w"], params["fc1_b"]
    w_kv = jnp.concatenate([jnp.dot(fc1_w, params["wk"], precision=hi),
                            jnp.dot(fc1_w, params["wv"], precision=hi)], axis=1)
    b_kv = jnp.concatenate([jnp.dot(fc1_b, params["wk"], precision=hi),
                            jnp.dot(fc1_b, params["wv"], precision=hi)])
    w_q = jnp.dot(fc1_w, params["wq"], precision=hi)
    b_q = jnp.dot(fc1_b, params["wq"], precision=hi)
    scale = 1.0 / math.sqrt(D)
    gw2_s = params["gw2"] * scale
    gb2_s = params["gb2"] * scale

    # Kernel 1: fused fc1 -> (k|v) projection; bf16 output halves gather traffic.
    tm1 = _proj_tile_rows(M, d_points, 2 * D)
    m1 = _round_up(M, tm1)
    kv_flat = kv_projection_pallas(_pad_rows(feat_flat, m1),
                                   w_kv.astype(jnp.bfloat16),
                                   b_kv[None, :].astype(jnp.float32), tm1)[:M]

    # Neighbor gather (data movement, plain JAX glue).
    # TODO(synk): for D*4B >= ~2 KiB rows this gather could move in-kernel via
    # PrefetchScalarGridSpec + make_async_copy; at small D the XLA gather wins.
    kv_g = kv_flat.reshape(B, N, 2 * D)[batch_idx, knn_idx].reshape(M, K, 2 * D)
    rel_flat = rel.reshape(M, K, 3)

    # Kernel 2: q proj, pos-enc MLP, gamma MLP, softmax, weighted sum, fc2 + residual.
    tm2 = _attn_tile_rows(M, K, D, d_points)
    m2 = _round_up(M, tm2)
    out_flat, attn_flat = attention_pallas(
        _pad_rows(feat_flat, m2), _pad_rows(kv_g, m2), _pad_rows(rel_flat, m2),
        w_q.astype(jnp.bfloat16), b_q[None, :],
        params["dw1"], params["db1"][None, :],
        params["dw2"].astype(jnp.bfloat16), params["db2"][None, :],
        params["gw1"].astype(jnp.bfloat16), params["gb1"][None, :],
        gw2_s.astype(jnp.bfloat16), gb2_s[None, :],
        params["fc2_w"].astype(jnp.bfloat16), params["fc2_b"][None, :],
        tm2)

    res = out_flat[:M].reshape(B, N, d_points)
    attn = attn_flat[:M].reshape(B, N, K, D)
    return res, attn


# ----------------------------------------------------------------------------
# Pure-JAX reference (mirrors the PyTorch forward) for correctness checking
# ----------------------------------------------------------------------------
def reference_forward(xyz, features, params, k_neighbors):
    B, _, N = xyz.shape
    D = params["fc1_w"].shape[1]
    xyz_t = jnp.transpose(xyz, (0, 2, 1)).astype(jnp.float32)
    pre = jnp.transpose(features, (0, 2, 1)).astype(jnp.float32)

    diff = xyz_t[:, :, None, :] - xyz_t[:, None, :, :]
    dists = jnp.sum(diff * diff, axis=-1)
    knn_idx = jnp.argsort(dists, axis=-1)[:, :, :k_neighbors]
    batch_idx = jnp.arange(B)[:, None, None]
    knn_xyz = xyz_t[batch_idx, knn_idx]

    with jax.default_matmul_precision("highest"):
        x = pre @ params["fc1_w"] + params["fc1_b"]
        q = x @ params["wq"]
        kk = (x @ params["wk"])[batch_idx, knn_idx]
        vv = (x @ params["wv"])[batch_idx, knn_idx]

        rel = xyz_t[:, :, None, :] - knn_xyz
        pos = jnp.maximum(rel @ params["dw1"] + params["db1"], 0.0)
        pos = pos @ params["dw2"] + params["db2"]

        g = jnp.maximum((q[:, :, None] - kk + pos) @ params["gw1"] + params["gb1"], 0.0)
        g = g @ params["gw2"] + params["gb2"]
        attn = jax.nn.softmax(g / math.sqrt(D), axis=-2)

        res = jnp.einsum("bmnf,bmnf->bmf", attn, vv + pos)
        res = res @ params["fc2_w"] + params["fc2_b"] + pre
    return res, attn


# ----------------------------------------------------------------------------
# Deterministic parameter init (matches nn.Linear default ranges; synthetic)
# ----------------------------------------------------------------------------
def init_linear(key, fan_in, fan_out, bias=True):
    kw, kb = jax.random.split(key)
    bound = 1.0 / math.sqrt(fan_in)
    w = jax.random.uniform(kw, (fan_in, fan_out), jnp.float32, -bound, bound)
    if not bias:
        return w, None
    b = jax.random.uniform(kb, (fan_out,), jnp.float32, -bound, bound)
    return w, b


def make_params(key, d_points, d_model):
    keys = jax.random.split(key, 9)
    fc1_w, fc1_b = init_linear(keys[0], d_points, d_model)
    fc2_w, fc2_b = init_linear(keys[1], d_model, d_points)
    dw1, db1 = init_linear(keys[2], 3, d_model)
    dw2, db2 = init_linear(keys[3], d_model, d_model)
    gw1, gb1 = init_linear(keys[4], d_model, d_model)
    gw2, gb2 = init_linear(keys[5], d_model, d_model)
    wq, _ = init_linear(keys[6], d_model, d_model, bias=False)
    wk, _ = init_linear(keys[7], d_model, d_model, bias=False)
    wv, _ = init_linear(keys[8], d_model, d_model, bias=False)
    return dict(fc1_w=fc1_w, fc1_b=fc1_b, fc2_w=fc2_w, fc2_b=fc2_b,
                dw1=dw1, db1=db1, dw2=dw2, db2=db2,
                gw1=gw1, gb1=gb1, gw2=gw2, gb2=gb2,
                wq=wq, wk=wk, wv=wv)


if __name__ == "__main__":
    B, N = 2, 16
    d_points, d_model, K = 8, 32, 4

    key = jax.random.PRNGKey(0)
    k_params, k_xyz, k_feat = jax.random.split(key, 3)
    params = make_params(k_params, d_points, d_model)
    xyz = jax.random.normal(k_xyz, (B, 3, N), jnp.float32)
    features = jax.random.normal(k_feat, (B, d_points, N), jnp.float32)

    res, attn = transformer_block_forward(xyz, features, params, K)
    res = jax.block_until_ready(res)
    attn = jax.block_until_ready(attn)

    res_ref, attn_ref = reference_forward(xyz, features, params, K)
    assert res.shape == (B, N, d_points) and attn.shape == (B, N, K, d_model)
    # bf16 MXU inputs (f32 accumulation) vs the fp32 HIGHEST reference.
    assert jnp.allclose(res, res_ref, rtol=3e-2, atol=3e-2), "res mismatch"
    assert jnp.allclose(attn, attn_ref, rtol=3e-2, atol=3e-2), "attn mismatch"

    print("KERNEL_OK")
</pallas_src>

<mosaic_0001>
module attributes {stable_mosaic.version = 11 : i64} {
  func.func @kv_proj_kernel(%arg0: i32, %arg1: memref<32x8xf32, #tpu.memory_space<vmem>>, %arg2: memref<8x64xbf16, #tpu.memory_space<vmem>>, %arg3: memref<1x64xf32, #tpu.memory_space<vmem>>, %arg4: memref<32x64xbf16, #tpu.memory_space<vmem>>) attributes {dimension_semantics = [#tpu.dimension_semantics<parallel>], iteration_bounds = array<i64: 1>, scalar_prefetch = 0 : i64, scratch_operands = 0 : i64, tpu.core_type = #tpu.core_type<tc>, window_params = [{transform_indices = @transform_0, window_bounds = array<i64: 32, 8>}, {pipeline_mode = #tpu.pipeline_mode<synchronous>, transform_indices = @transform_1, window_bounds = array<i64: 8, 64>}, {pipeline_mode = #tpu.pipeline_mode<synchronous>, transform_indices = @transform_2, window_bounds = array<i64: 1, 64>}, {transform_indices = @transform_3, window_bounds = array<i64: 32, 64>}]} {
    %c0 = arith.constant 0 : index
    %c0_0 = arith.constant 0 : index
    %0 = vector.load %arg1[%c0, %c0_0] : memref<32x8xf32, #tpu.memory_space<vmem>>, vector<32x8xf32>
    %1 = arith.truncf %0 : vector<32x8xf32> to vector<32x8xbf16>
    %c0_1 = arith.constant 0 : index
    %c0_2 = arith.constant 0 : index
    %2 = vector.load %arg2[%c0_1, %c0_2] : memref<8x64xbf16, #tpu.memory_space<vmem>>, vector<8x64xbf16>
    %cst = arith.constant dense<0.000000e+00> : vector<32x64xf32>
    %3 = tpu.matmul %1, %2, %cst {dimension_numbers = #tpu.dot_dimension_numbers<[1], [0], [0], [1], [0, 0, 1, 1], [], []>} : vector<32x8xbf16>, vector<8x64xbf16>, vector<32x64xf32> -> vector<32x64xf32>
    %c0_3 = arith.constant 0 : index
    %c0_4 = arith.constant 0 : index
    %4 = vector.load %arg3[%c0_3, %c0_4] : memref<1x64xf32, #tpu.memory_space<vmem>>, vector<1x64xf32>
    %5 = vector.broadcast %4 : vector<1x64xf32> to vector<32x64xf32>
    %6 = arith.addf %3, %5 : vector<32x64xf32>
    %7 = arith.truncf %6 : vector<32x64xf32> to vector<32x64xbf16>
    %c0_5 = arith.constant 0 : index
    %c0_6 = arith.constant 0 : index
    %8 = vector.load %arg4[%c0_5, %c0_6] : memref<32x64xbf16, #tpu.memory_space<vmem>>, vector<32x64xbf16>
    tpu.vector_store %arg4[%c0_5, %c0_6], %7 {strides = array<i32>} : memref<32x64xbf16, #tpu.memory_space<vmem>>, vector<32x64xbf16>,
    return
  }
  func.func @transform_0(%arg0: i32) -> (i32, i32) {
    %c0_i32 = arith.constant 0 : i32
    %c0_i32_0 = arith.constant 0 : i32
    return %arg0, %c0_i32 : i32, i32
  }
  func.func @transform_1(%arg0: i32) -> (i32, i32) {
    %c0_i32 = arith.constant 0 : i32
    %c0_i32_0 = arith.constant 0 : i32
    %c0_i32_1 = arith.constant 0 : i32
    return %c0_i32, %c0_i32_0 : i32, i32
  }
  func.func @transform_2(%arg0: i32) -> (i32, i32) {
    %c0_i32 = arith.constant 0 : i32
    %c0_i32_0 = arith.constant 0 : i32
    %c0_i32_1 = arith.constant 0 : i32
    return %c0_i32, %c0_i32_0 : i32, i32
  }
  func.func @transform_3(%arg0: i32) -> (i32, i32) {
    %c0_i32 = arith.constant 0 : i32
    %c0_i32_0 = arith.constant 0 : i32
    return %arg0, %c0_i32 : i32, i32
  }
}

</mosaic_0001>

<llo_original>
// kernel: tpu_custom_call.1
$region0: #{tpu_custom_call.1}
  #allocation0 [shape = 'u32[]', space=smem, size = 0x4, offset = 0x4, fixed_abs, tag = 'smem constant byte address 0x4 - core index']
  #allocation1 [shape = 'u32[144,128]{1,0:T(1,128)}', space=vmem, size = 0x12000, scoped, tag = 'internal scratch']
  %s0 = inlined_call_operand.vmem [shape: f32[32,8], index: 0, kind: input, shape index: {}]
  %s1 = inlined_call_operand.vmem [shape: bf16[8,64], index: 1, kind: input, shape index: {}]
  %s2 = inlined_call_operand.vmem [shape: f32[1,64], index: 2, kind: input, shape index: {}]
  %s3 = inlined_call_operand.hbm [shape: bf16[32,64], index: 3, kind: output, shape index: {}]
  %s4 = sld [smem:[#allocation0]]
  $region22: #{tpu_custom_call.1} parent=0
    _
  %s6 = ssub.s32 1, %s4
  %s7 = scalar_select 0, %s6, %s4
  $region1: #{tpu_custom_call.1} parent=0
    #allocation2 [shape = 'u8[8192]{0}', space=vmem, size = 0x2000, scoped, tag = 'output window, operand 0, single buffered']
    #allocation3 [shape = 's32[1]{0}', space=sflag, size = 0x4, scoped, tag = 'scoped memory for tpu_custom_call.1']
    %8 = vsyncpa [#allocation3], 0
    // Predicated region
    $region2: #{tpu_custom_call.1} parent=1 // pred_check
      _
    $region3: #{tpu_custom_call.1} parent=1 // pred_check_branch
      %10 = sbr.rel (0) target = $region5
    $region4: #{tpu_custom_call.1} parent=1 // pred_region
      _
    $region5: #{tpu_custom_call.1} parent=1 // pred_fallthru
      _
    // Predicated region
    $region6: #{tpu_custom_call.1} parent=1 // pred_check
      _
    $region7: #{tpu_custom_call.1} parent=1 // pred_check_branch
      %12 = sbr.rel (0) target = $region9
    $region8: #{tpu_custom_call.1} parent=1 // pred_region
      _
    $region9: #{tpu_custom_call.1} parent=1 // pred_fallthru
      _
    // Predicated region
    $region10: #{tpu_custom_call.1} parent=1 // pred_check
      _
    $region11: #{tpu_custom_call.1} parent=1 // pred_check_branch
      %14 = sbr.rel (0) target = $region13
    $region12: #{tpu_custom_call.1} parent=1 // pred_region
      _
    $region13: #{tpu_custom_call.1} parent=1 // pred_fallthru
      _
    %v16 = vld [vmem:[%s0] sm:$0xff]
    %v17 = vld [vmem:[%s0 + $0x8] sm:$0xff]
    %v18 = vld [vmem:[%s0 + $0x10] sm:$0xff]
    %v19 = vld [vmem:[%s0 + $0x18] sm:$0xff]
    %v20 = vpack.c.bf16 %v17, %v16
    %v21 = vpack.c.bf16 %v19, %v18
    %v22 = vld [vmem:[%s1] sm:$0xf]
    %v23 = vld [vmem:[%s2] sm:$0x1]
    %v25 = vlaneseq
    %v26 = vshrl.u32 %v25, 7
    %v27 = vsub.s32 0, %v26
    %v28 = vrot.slane %v23, %v27
    %vm30 = vcmask 64512
    %v32 = vsel %vm30, %v20, 0
    %v35 = vsel %vm30, %v21, 0
    %vm37 = vcmask 1043456
    %v39 = vsel %vm37, %v22, 0
    %41 = vmatprep.subr.bf16.mxu0 0
    %42 = vmatpush1.bf16.msra.mxu0 0
    %43 = vmatprep.subr.bf16.mxu0 0
    %44 = vmatpush1.bf16.msra.mxu0 0
    %45 = vmatprep.subr.bf16.mxu0 0
    %46 = vmatpush1.bf16.msra.mxu0 0
    %47 = vmatprep.subr.bf16.mxu0 0
    %48 = vmatpush1.bf16.msra.mxu0 0
    %49 = vmatprep.subr.bf16.mxu0 0
    %50 = vmatpush1.bf16.msra.mxu0 0
    %51 = vmatprep.subr.bf16.mxu0 0
    %52 = vmatpush1.bf16.msra.mxu0 0
    %53 = vmatprep.subr.bf16.mxu0 0
    %54 = vmatpush1.bf16.msra.mxu0 0
    %55 = vmatprep.subr.bf16.mxu0 0
    %56 = vmatpush1.bf16.msra.mxu0 %v39
    %57 = vmatprep.subr.bf16.mxu0 0
    %58 = vmatpush2.bf16.msra.mxu0 0
    %59 = vmatprep.subr.bf16.mxu0 0
    %60 = vmatpush2.bf16.msra.mxu0 0
    %61 = vmatprep.subr.bf16.mxu0 0
    %62 = vmatpush2.bf16.msra.mxu0 0
    %63 = vmatprep.subr.bf16.mxu0 0
    %64 = vmatpush2.bf16.msra.mxu0 0
    %65 = vmatprep.subr.bf16.mxu0 0
    %66 = vmatpush2.bf16.msra.mxu0 0
    %67 = vmatprep.subr.bf16.mxu0 0
    %68 = vmatpush2.bf16.msra.mxu0 0
    %69 = vmatprep.subr.bf16.mxu0 0
    %70 = vmatpush2.bf16.msra.mxu0 0
    %71 = vmatprep.subr.bf16.mxu0 0
    %72 = vmatpush2.bf16.msra.mxu0 0
    %73 = vmatprep.mubr.bf16.mxu0 0
    %74 = vmatmul.mubr.bf16.gmra.mxu0 %v32
    %v75 = vpop.f32.mrf.mxu0
    %v76 = vadd.f32 %v28, %v75
    %v77 = vpop.f32.mrf.mxu0
    %v78 = vpop.f32.mrf.mxu0
    %v79 = vadd.f32 %v28, %v78
    %v80 = vpop.f32.mrf.mxu0
    %81 = vmatprep.mubr.bf16.mxu0 0
    %82 = vmatmul.mubr.bf16.gmra.mxu0 %v35
    %v83 = vpop.f32.mrf.mxu0
    %v84 = vadd.f32 %v28, %v83
    %v85 = vpop.f32.mrf.mxu0
    %v86 = vpop.f32.mrf.mxu0
    %v87 = vadd.f32 %v28, %v86
    %v88 = vpop.f32.mrf.mxu0
    %89 = vdwg.mxu0
    %v90 = vpack.c.bf16 %v79, %v76
    %v91 = vpack.c.bf16 %v87, %v84
    %v94 = vunpack.c.l.b16 %v90
    %v95 = vunpack.c.h.b16 %v90
    %v96 = vunpack.c.l.b16 %v91
    %v97 = vunpack.c.h.b16 %v91
    %v98 = vpack.c.b16 %v94, %v94
    %v99 = vpack.c.b16 %v95, %v95
    %v100 = vpack.c.b16 %v96, %v96
    %v101 = vpack.c.b16 %v97, %v97
    %vm106 = vcmask 519168
    %107 = vst.msk [vmem:[#allocation2] sm:$0xf] %vm106, %v98
    %108 = vst.msk [vmem:[#allocation2 + $0x4] sm:$0xf] %vm106, %v99
    %109 = vst.msk [vmem:[#allocation2 + $0x8] sm:$0xf] %vm106, %v100
    %110 = vst.msk [vmem:[#allocation2 + $0xc] sm:$0xf] %vm106, %v101
    // Predicated region
    $region14: #{tpu_custom_call.1} parent=1 // pred_check
      _
    $region15: #{tpu_custom_call.1} parent=1 // pred_check_branch
      %112 = sbr.rel (0) target = $region17
    $region16: #{tpu_custom_call.1} parent=1 // pred_region
      %s114 = ssub.s32 256, 256
      %115 = vsyncadd [#allocation3], %s114
      %s116 = sshll.u32 [#allocation2], 4
      %s117 = int_to_ptr.vmem [resolvable:$true] %s116
      %122 = dma.vmem_to_hbm [thread:$0]  %s117, 256, %s3, [#allocation3], 64, 64, 4
    $region17: #{tpu_custom_call.1} parent=1 // pred_fallthru
      _
    // Predicated region
    $region18: #{tpu_custom_call.1} parent=1 // pred_check
      _
    $region19: #{tpu_custom_call.1} parent=1 // pred_check_branch
      %124 = sbr.rel (0) target = $region21
    $region20: #{tpu_custom_call.1} parent=1 // pred_region
      %125 = dma.done [#allocation3], 256
    $region21: #{tpu_custom_call.1} parent=1 // pred_fallthru
      _
    %126 = vsyncpa [#allocation3], 1

</llo_original>
